<compile_context>
chip_gen: v7x
topology: tpu7x:2x2x1
jax: 0.10.0
libtpu: 0.0.40
codegen_flags: <defaults>
</compile_context>

<pallas_src>
import functools

import jax
import jax.numpy as jnp
from jax.experimental import pallas as pl
from jax.experimental.pallas import tpu as pltpu


def _focal_kernel(n_ref, logits_ref, tgt_ref, *rest, gamma, ignore_index,
                  tile_cols, alpha_const):
    """One grid step: partial focal-loss sum / valid-token count for a chunk."""
    if alpha_const is None:          # per-class alpha vector is a kernel input
        alpha_ref, out_ref = rest
    else:                            # scalar / None alpha baked at compile time
        alpha_ref = None
        (out_ref,) = rest

    # Class-major, tokens-on-lanes block.
    logits = logits_ref[...].astype(jnp.float32)              # (C, T)
    tgt = tgt_ref[...]                                          # (1, T) int32

    # Token validity: in-bounds (ragged last block; n read from SMEM scalar
    # prefetch) AND not ignore_index.
    n_tokens = n_ref[0]
    col = (pl.program_id(0) * tile_cols
           + jax.lax.broadcasted_iota(jnp.int32, tgt.shape, 1))  # (1, T)
    valid = (col < n_tokens) & (tgt != ignore_index)             # (1, T)
    safe_t = jnp.where(valid, tgt, 0)

    cls = jax.lax.broadcasted_iota(jnp.int32, logits.shape, 0)   # (C, T)
    one_hot = (cls == safe_t).astype(jnp.float32)                # (C, T)

    # Softmax pieces; the only full-width EUP pass is exp(logits - m).
    m = jnp.max(logits, axis=0, keepdims=True)                   # (1, T)
    p = jnp.exp(logits - m)                                       # (C, T)
    s = jnp.sum(p, axis=0, keepdims=True)                         # (1, T)
    logit_t = jnp.sum(one_hot * logits, axis=0, keepdims=True)    # (1, T)

    ce = jnp.log(s) + m - logit_t                                 # exact CE
    pt = jnp.exp(logit_t - m) * pl.reciprocal(s, approx=True)     # no gather

    one_minus_pt = jnp.maximum(1.0 - pt, 0.0)                     # clamp for pow
    g = float(gamma)
    if g == 0.0:
        mod = jnp.ones_like(one_minus_pt)
    elif g.is_integer() and 0.0 < g <= 4.0:
        mod = one_minus_pt                                        # int gamma: muls
        for _ in range(int(g) - 1):
            mod = mod * one_minus_pt
    else:
        mod = jnp.power(one_minus_pt, g)

    if alpha_const is None:
        alpha = alpha_ref[...].astype(jnp.float32)                # (C, 1) resident
        alpha_t = jnp.sum(one_hot * alpha, axis=0, keepdims=True)  # (1, T)
        fl = alpha_t * (mod * ce)
    elif alpha_const == 1.0:
        fl = mod * ce
    else:
        fl = alpha_const * (mod * ce)

    # Select (not multiply): garbage in out-of-bounds columns cannot poison sums.
    fl = jnp.where(valid, fl, 0.0)

    part_sum = jnp.sum(fl)
    part_cnt = jnp.sum(valid.astype(jnp.float32))

    # Single packed (1, 8, 128) output block per step: sublane 0 = partial sum,
    # remaining sublanes = partial count.  Wrapper reads [:, 0, 0] / [:, 1, 0].
    sub = jax.lax.broadcasted_iota(jnp.int32, out_ref.shape, 1)
    out_ref[...] = jnp.where(sub == 0, part_sum, part_cnt)


def focal_loss(logits, targets, *, num_labels, alpha=None, gamma=2.0,
               ignore_index=-100, reduction="mean", tile_n=8192):
    """Pallas TPU focal loss. logits: [..., num_labels]; targets: [...]."""
    # Tokens-on-lanes layout: class-major logits (C, N), lane-dense targets (1, N).
    logits_cn = logits.reshape(-1, num_labels).T            # keeps HBM dtype
    targets_1n = targets.reshape(1, -1).astype(jnp.int32)
    n = targets_1n.shape[1]

    # Token-tile (lane) size: multiple of 128, large (amortizes ~0.35us/step),
    # capped at ~n/2 so grid_size >= 2 where it matters (v7x has 2 TCs and the
    # single "parallel" grid axis is how work shards across them).
    tile_cap = max(128, (int(tile_n) // 128) * 128)
    if n >= 256:
        half = ((-(-n // 2)) + 127) // 128 * 128             # round_up(cdiv(n,2),128)
        tile = min(tile_cap, half)                            # multiple of 128, < n
    else:
        tile = n                                              # single full-extent block
    grid_size = -(-n // tile)                                 # cdiv; last block ragged

    # Alpha: scalar / None is baked in; per-class vector is a resident (C,1) input.
    if alpha is None:
        alpha_const, alpha_vec = 1.0, None
    elif isinstance(alpha, (int, float)):
        alpha_const, alpha_vec = float(alpha), None
    else:
        alpha_const = None
        alpha_vec = jnp.asarray(alpha, jnp.float32).reshape(num_labels, 1)

    kernel = functools.partial(
        _focal_kernel, gamma=float(gamma), ignore_index=int(ignore_index),
        tile_cols=int(tile), alpha_const=alpha_const)

    in_specs = [
        pl.BlockSpec((num_labels, tile), lambda i, n_ref: (0, i)),   # logits chunk
        pl.BlockSpec((1, tile), lambda i, n_ref: (0, i)),            # targets chunk
    ]
    args = [logits_cn, targets_1n]
    if alpha_vec is not None:
        in_specs.append(pl.BlockSpec((num_labels, 1), lambda i, n_ref: (0, 0)))
        args.append(alpha_vec)

    out_spec = pl.BlockSpec((1, 8, 128), lambda i, n_ref: (i, 0, 0))
    out_shape = jax.ShapeDtypeStruct((grid_size, 8, 128), jnp.float32)

    # VMEM budget: sublane-padded input blocks x2 (double buffer) + f32
    # intermediates + slack, clamped to <= 32 MiB (v7x has only 64 MiB per TC).
    c_pad = -(-num_labels // 8) * 8
    block_bytes = c_pad * tile * 4 + 8 * tile * 4
    vmem_limit = 2 * block_bytes + 4 * c_pad * tile * 4 + (4 << 20)
    vmem_limit = int(min(max(vmem_limit, 16 << 20), 32 << 20))

    n_arr = jnp.asarray([n], dtype=jnp.int32)   # scalar-prefetch token count

    # TODO(synk): if post-layout profiling shows exposed DMA, add
    # pipeline_mode=pl.Buffered(3) on the logits BlockSpec (sweep 2 vs 3).
    parts = pl.pallas_call(
        kernel,
        out_shape=out_shape,
        grid_spec=pltpu.PrefetchScalarGridSpec(
            num_scalar_prefetch=1,
            grid=(grid_size,),
            in_specs=in_specs,
            out_specs=out_spec,
        ),
        compiler_params=pltpu.CompilerParams(
            dimension_semantics=("parallel",),      # shards across v7x's 2 TCs
            vmem_limit_bytes=vmem_limit),
    )(n_arr, *args)

    loss_sum = jnp.sum(parts[:, 0, 0])
    valid_cnt = jnp.sum(parts[:, 1, 0])

    if reduction == "mean":
        # Matches PyTorch: returns 0.0 when there are no valid tokens.
        return jnp.where(valid_cnt > 0,
                         loss_sum / jnp.maximum(valid_cnt, 1.0),
                         jnp.float32(0.0))
    elif reduction == "sum":
        return loss_sum
    else:
        # TODO(synk): reduction='none' needs a dynamic-shape masked gather of
        # per-token losses; only 'mean'/'sum' are computed in-kernel.
        raise NotImplementedError("reduction='none' not supported")


def _reference_focal_loss(logits, targets, *, num_labels, alpha, gamma,
                          ignore_index):
    """Pure-JAX reference mirroring the PyTorch forward (mean reduction)."""
    logits2d = logits.reshape(-1, num_labels).astype(jnp.float32)
    tgt = targets.reshape(-1).astype(jnp.int32)
    valid = tgt != ignore_index
    safe_t = jnp.where(valid, tgt, 0)
    logp = jax.nn.log_softmax(logits2d, axis=-1)
    ce = -jnp.take_along_axis(logp, safe_t[:, None], axis=-1)[:, 0]
    pt = jnp.exp(-ce)
    if alpha is None:
        alpha_vec = jnp.ones((num_labels,), jnp.float32)
    elif isinstance(alpha, (int, float)):
        alpha_vec = jnp.full((num_labels,), float(alpha), jnp.float32)
    else:
        alpha_vec = jnp.asarray(alpha, jnp.float32)
    fl = alpha_vec[safe_t] * (1.0 - pt) ** gamma * ce
    fl = jnp.where(valid, fl, 0.0)
    cnt = jnp.sum(valid.astype(jnp.float32))
    return jnp.where(cnt > 0, jnp.sum(fl) / jnp.maximum(cnt, 1.0), 0.0)


if __name__ == "__main__":
    num_labels = 9
    ignore_index = -100
    key = jax.random.PRNGKey(0)

    # --- Test 1: scalar alpha, gamma=2, single full-extent block (n=32) -----
    batch, seq = 2, 16
    k1, k2, k3, key = jax.random.split(key, 4)
    logits = jax.random.normal(k1, (batch, seq, num_labels), jnp.float32)
    targets = jax.random.randint(k2, (batch, seq), 0, num_labels, jnp.int32)
    drop = jax.random.bernoulli(k3, 0.25, (batch, seq))
    targets = jnp.where(drop, jnp.int32(ignore_index), targets)

    out = focal_loss(logits, targets, num_labels=num_labels, alpha=0.25,
                     gamma=2.0, ignore_index=ignore_index, reduction="mean")
    out = jax.block_until_ready(out)
    ref = _reference_focal_loss(logits, targets, num_labels=num_labels,
                                alpha=0.25, gamma=2.0,
                                ignore_index=ignore_index)
    assert jnp.allclose(out, ref, rtol=2e-3, atol=1e-5), (out, ref)

    # --- Test 2: vector alpha, multi-block grid with a ragged tail ----------
    # n = 300 tokens -> tile = 128, grid = (3,), last block has 44 valid lanes.
    batch2, seq2 = 2, 150
    alpha_list = [0.1, 0.2, 0.3, 0.4, 0.5, 0.6, 0.7, 0.8, 0.9]
    k4, k5, k6, key = jax.random.split(key, 4)
    logits2 = jax.random.normal(k4, (batch2, seq2, num_labels), jnp.float32)
    targets2 = jax.random.randint(k5, (batch2, seq2), 0, num_labels, jnp.int32)
    drop2 = jax.random.bernoulli(k6, 0.25, (batch2, seq2))
    targets2 = jnp.where(drop2, jnp.int32(ignore_index), targets2)

    out2 = focal_loss(logits2, targets2, num_labels=num_labels,
                      alpha=alpha_list, gamma=2.0, ignore_index=ignore_index,
                      reduction="mean", tile_n=128)
    out2 = jax.block_until_ready(out2)
    ref2 = _reference_focal_loss(logits2, targets2, num_labels=num_labels,
                                 alpha=alpha_list, gamma=2.0,
                                 ignore_index=ignore_index)
    assert jnp.allclose(out2, ref2, rtol=2e-3, atol=1e-5), (out2, ref2)

    # --- Test 3: all tokens ignored -> 0.0 (PyTorch early-return path) ------
    targets3 = jnp.full((batch, seq), ignore_index, jnp.int32)
    out3 = focal_loss(logits, targets3, num_labels=num_labels, alpha=0.25,
                      gamma=2.0, ignore_index=ignore_index, reduction="mean")
    out3 = jax.block_until_ready(out3)
    assert jnp.allclose(out3, 0.0), out3

    print("KERNEL_OK")
</pallas_src>

<mosaic_0001>
module attributes {stable_mosaic.version = 11 : i64} {
  func.func @_focal_kernel(%arg0: i32, %arg1: memref<1xi32, #tpu.memory_space<smem>>, %arg2: memref<9x32xf32, #tpu.memory_space<vmem>>, %arg3: memref<1x32xi32, #tpu.memory_space<vmem>>, %arg4: memref<1x8x128xf32, #tpu.memory_space<vmem>>) attributes {dimension_semantics = [#tpu.dimension_semantics<parallel>], iteration_bounds = array<i64: 1>, scalar_prefetch = 1 : i64, scratch_operands = 0 : i64, tpu.core_type = #tpu.core_type<tc>, window_params = [{transform_indices = @transform_0, window_bounds = array<i64: 9, 32>}, {transform_indices = @transform_1, window_bounds = array<i64: 1, 32>}, {transform_indices = @transform_2, window_bounds = array<i64: 1, 8, 128>}]} {
    %c0 = arith.constant 0 : index
    %c0_0 = arith.constant 0 : index
    %0 = vector.load %arg2[%c0, %c0_0] : memref<9x32xf32, #tpu.memory_space<vmem>>, vector<9x32xf32>
    %c0_1 = arith.constant 0 : index
    %c0_2 = arith.constant 0 : index
    %1 = vector.load %arg3[%c0_1, %c0_2] : memref<1x32xi32, #tpu.memory_space<vmem>>, vector<1x32xi32>
    %c0_3 = arith.constant 0 : index
    %2 = memref.load %arg1[%c0_3] : memref<1xi32, #tpu.memory_space<smem>>
    %c32_i32 = arith.constant 32 : i32
    %3 = arith.muli %arg0, %c32_i32 : i32
    %4 = tpu.iota {dimensions = array<i32: 1>} : vector<1x32xi32>
    %5 = vector.broadcast %3 : i32 to vector<1x32xi32>
    %6 = arith.addi %5, %4 : vector<1x32xi32>
    %7 = vector.broadcast %2 : i32 to vector<1x32xi32>
    %8 = arith.cmpi slt, %6, %7 : vector<1x32xi32>
    %c-100_i32 = arith.constant -100 : i32
    %9 = vector.broadcast %c-100_i32 : i32 to vector<1x32xi32>
    %10 = arith.cmpi ne, %1, %9 : vector<1x32xi32>
    %11 = arith.andi %8, %10 : vector<1x32xi1>
    %c0_i32 = arith.constant 0 : i32
    %12 = vector.broadcast %c0_i32 : i32 to vector<1x32xi32>
    %13 = arith.select %11, %1, %12 : vector<1x32xi1>, vector<1x32xi32>
    %14 = tpu.iota {dimensions = array<i32: 0>} : vector<9x32xi32>
    %15 = vector.broadcast %13 : vector<1x32xi32> to vector<9x32xi32>
    %16 = arith.cmpi eq, %14, %15 : vector<9x32xi32>
    %17 = arith.extui %16 : vector<9x32xi1> to vector<9x32xi32>
    %18 = arith.sitofp %17 : vector<9x32xi32> to vector<9x32xf32>
    %cst = arith.constant dense<0xFF800000> : vector<32xf32>
    %19 = vector.multi_reduction <maximumf>, %0, %cst [0] : vector<9x32xf32> to vector<32xf32>
    %20 = vector.shape_cast %19 : vector<32xf32> to vector<1x32xf32>
    %21 = vector.broadcast %20 : vector<1x32xf32> to vector<9x32xf32>
    %22 = arith.subf %0, %21 : vector<9x32xf32>
    %23 = math.exp %22 : vector<9x32xf32>
    %cst_4 = arith.constant dense<0.000000e+00> : vector<32xf32>
    %24 = vector.multi_reduction <add>, %23, %cst_4 [0] : vector<9x32xf32> to vector<32xf32>
    %25 = vector.shape_cast %24 : vector<32xf32> to vector<1x32xf32>
    %26 = arith.mulf %18, %0 : vector<9x32xf32>
    %cst_5 = arith.constant dense<0.000000e+00> : vector<32xf32>
    %27 = vector.multi_reduction <add>, %26, %cst_5 [0] : vector<9x32xf32> to vector<32xf32>
    %28 = vector.shape_cast %27 : vector<32xf32> to vector<1x32xf32>
    %29 = math.log %25 : vector<1x32xf32>
    %30 = arith.addf %29, %20 : vector<1x32xf32>
    %31 = arith.subf %30, %28 : vector<1x32xf32>
    %32 = arith.subf %28, %20 : vector<1x32xf32>
    %33 = math.exp %32 : vector<1x32xf32>
    %34 = tpu.reciprocal %25 {approx = true} : vector<1x32xf32> -> vector<1x32xf32>
    %35 = arith.mulf %33, %34 : vector<1x32xf32>
    %cst_6 = arith.constant 1.000000e+00 : f32
    %36 = vector.broadcast %cst_6 : f32 to vector<1x32xf32>
    %37 = arith.subf %36, %35 : vector<1x32xf32>
    %cst_7 = arith.constant 0.000000e+00 : f32
    %38 = vector.broadcast %cst_7 : f32 to vector<1x32xf32>
    %39 = arith.maximumf %37, %38 : vector<1x32xf32>
    %40 = arith.mulf %39, %39 : vector<1x32xf32>
    %41 = arith.mulf %40, %31 : vector<1x32xf32>
    %cst_8 = arith.constant 2.500000e-01 : f32
    %42 = vector.broadcast %cst_8 : f32 to vector<1x32xf32>
    %43 = arith.mulf %42, %41 : vector<1x32xf32>
    %cst_9 = arith.constant 0.000000e+00 : f32
    %44 = vector.broadcast %cst_9 : f32 to vector<1x32xf32>
    %45 = arith.select %11, %43, %44 : vector<1x32xi1>, vector<1x32xf32>
    %46 = vector.shape_cast %45 : vector<1x32xf32> to vector<1x1x32xf32>
    %cst_10 = arith.constant dense<0.000000e+00> : vector<1xf32>
    %47 = vector.multi_reduction <add>, %46, %cst_10 [1, 2] : vector<1x1x32xf32> to vector<1xf32>
    %48 = vector.shape_cast %47 : vector<1xf32> to vector<1x1x1xf32>
    %49 = vector.extract %48[0, 0, 0] : f32 from vector<1x1x1xf32>
    %50 = arith.extui %11 : vector<1x32xi1> to vector<1x32xi32>
    %51 = arith.sitofp %50 : vector<1x32xi32> to vector<1x32xf32>
    %52 = vector.shape_cast %51 : vector<1x32xf32> to vector<1x1x32xf32>
    %cst_11 = arith.constant dense<0.000000e+00> : vector<1xf32>
    %53 = vector.multi_reduction <add>, %52, %cst_11 [1, 2] : vector<1x1x32xf32> to vector<1xf32>
    %54 = vector.shape_cast %53 : vector<1xf32> to vector<1x1x1xf32>
    %55 = vector.extract %54[0, 0, 0] : f32 from vector<1x1x1xf32>
    %56 = tpu.iota {dimensions = array<i32: 1>} : vector<1x8x128xi32>
    %c0_i32_12 = arith.constant 0 : i32
    %57 = vector.broadcast %c0_i32_12 : i32 to vector<1x8x128xi32>
    %58 = arith.cmpi eq, %56, %57 : vector<1x8x128xi32>
    %59 = vector.broadcast %49 : f32 to vector<1x8x128xf32>
    %60 = vector.broadcast %55 : f32 to vector<1x8x128xf32>
    %61 = arith.select %58, %59, %60 : vector<1x8x128xi1>, vector<1x8x128xf32>
    %c0_13 = arith.constant 0 : index
    %c0_14 = arith.constant 0 : index
    %c0_15 = arith.constant 0 : index
    %62 = vector.load %arg4[%c0_13, %c0_14, %c0_15] : memref<1x8x128xf32, #tpu.memory_space<vmem>>, vector<1x8x128xf32>
    tpu.vector_store %arg4[%c0_13, %c0_14, %c0_15], %61 {strides = array<i32>} : memref<1x8x128xf32, #tpu.memory_space<vmem>>, vector<1x8x128xf32>,
    return
  }
  func.func @transform_0(%arg0: i32, %arg1: memref<1xi32, #tpu.memory_space<smem>>) -> (i32, i32) {
    %c0_i32 = arith.constant 0 : i32
    %c0_i32_0 = arith.constant 0 : i32
    return %c0_i32, %arg0 : i32, i32
  }
  func.func @transform_1(%arg0: i32, %arg1: memref<1xi32, #tpu.memory_space<smem>>) -> (i32, i32) {
    %c0_i32 = arith.constant 0 : i32
    %c0_i32_0 = arith.constant 0 : i32
    return %c0_i32, %arg0 : i32, i32
  }
  func.func @transform_2(%arg0: i32, %arg1: memref<1xi32, #tpu.memory_space<smem>>) -> (i32, i32, i32) {
    %c0_i32 = arith.constant 0 : i32
    %c0_i32_0 = arith.constant 0 : i32
    %c0_i32_1 = arith.constant 0 : i32
    return %arg0, %c0_i32, %c0_i32_0 : i32, i32, i32
  }
}

</mosaic_0001>

<llo_original>
// kernel: tpu_custom_call.1
$region0: #{tpu_custom_call.1}
  #allocation0 [shape = 'u32[]', space=smem, size = 0x4, offset = 0x4, fixed_abs, tag = 'smem constant byte address 0x4 - core index']
  #allocation1 [shape = 'u32[144,128]{1,0:T(1,128)}', space=vmem, size = 0x12000, scoped, tag = 'internal scratch']
  #allocation2 [shape = 's32[1]{0}', space=sflag, size = 0x4, scoped, tag = 'scoped memory for tpu_custom_call.1']
  #allocation3 [shape = 's32[1]{0:T(128)S(6)}', space=smem, size = 0x200, scoped, tag = 'prefetched SMEM operand 0']
  %s0 = inlined_call_operand.<no memory space> [shape: s32[1], index: 0, kind: input, shape index: {}]
  %s1 = inlined_call_operand.hbm [shape: f32[9,32], index: 1, kind: input, shape index: {}]
  %s2 = inlined_call_operand.vmem [shape: s32[1,32], index: 2, kind: input, shape index: {}]
  %s3 = inlined_call_operand.hbm [shape: f32[1,8,128], index: 3, kind: output, shape index: {}]
  %s4 = sld [smem:[#allocation0]]
  $region22: #{tpu_custom_call.1} parent=0
    _
  %s6 = ssub.s32 1, %s4
  %s7 = scalar_select 0, %s6, %s4
  %8 = sst [smem:[#allocation3]] %s0
  $region1: #{tpu_custom_call.1} parent=0
    #allocation4 [shape = 'u8[8192]{0}', space=vmem, size = 0x2000, scoped, tag = 'input window, operand 1, single buffered']
    #allocation5 [shape = 's32[1]{0}', space=sflag, size = 0x4, scoped, tag = 'scoped memory for tpu_custom_call.1']
    #allocation6 [shape = 's32[1]{0}', space=sflag, size = 0x4, scoped, tag = 'scoped memory for tpu_custom_call.1']
    #allocation7 [shape = 'u8[4096]{0}', space=vmem, size = 0x1000, scoped, tag = 'output window, operand 0, single buffered']
    %9 = vsyncpa [#allocation5], 0
    %10 = vsyncpa [#allocation6], 0
    // Predicated region
    $region2: #{tpu_custom_call.1} parent=1 // pred_check
      _
    $region3: #{tpu_custom_call.1} parent=1 // pred_check_branch
      %12 = sbr.rel (0) target = $region5
    $region4: #{tpu_custom_call.1} parent=1 // pred_region
      %s14 = ssub.s32 256, 256
      %15 = vsyncadd [#allocation5], %s14
      %s16 = sshll.u32 [#allocation4], 4
      %s17 = int_to_ptr.vmem [resolvable:$true] %s16
      %22 = dma.hbm_to_vmem [thread:$0]  %s1, 256, %s17, [#allocation5], 128, 128, 8
    $region5: #{tpu_custom_call.1} parent=1 // pred_fallthru
      _
    // Predicated region
    $region6: #{tpu_custom_call.1} parent=1 // pred_check
      _
    $region7: #{tpu_custom_call.1} parent=1 // pred_check_branch
      %24 = sbr.rel (0) target = $region9
    $region8: #{tpu_custom_call.1} parent=1 // pred_region
      _
    $region9: #{tpu_custom_call.1} parent=1 // pred_fallthru
      _
    // Predicated region
    $region10: #{tpu_custom_call.1} parent=1 // pred_check
      _
    $region11: #{tpu_custom_call.1} parent=1 // pred_check_branch
      %26 = sbr.rel (0) target = $region13
    $region12: #{tpu_custom_call.1} parent=1 // pred_region
      %27 = dma.done [#allocation5], 256
    $region13: #{tpu_custom_call.1} parent=1 // pred_fallthru
      _
    %v28 = vld [vmem:[#allocation4] sm:$0xff]
    %v29 = vld [vmem:[#allocation4 + $0x8] sm:$0x1]
    %v30 = vld [vmem:[%s2] sm:$0x1]
    %s31 = sld [smem:[#allocation3]]
    %s32 = smul.u32 0, 32
    %v33 = vlaneseq
    %v34 = vand.u32 %v33, 127
    %v35 = vstv %s32
    %v36 = vadd.s32 %v35, %v34
    %v37 = vstv %s31
    %vm38 = vcmp.lt.s32.totalorder %v36, %v37
    %vm39 = vcmp.ne.s32.totalorder %v30, 4294967196
    %vm40 = vmand %vm38, %vm39
    %v41 = vsel %vm40, %v30, 0
    %v42 = vlaneseq
    %v43 = vshrl.u32 %v42, 7
    %v44 = vadd.s32 %v43, 8
    %v45 = vlaneseq
    %v46 = vshrl.u32 %v45, 7
    %v47 = vsub.s32 0, %v46
    %v48 = vrot.slane %v41, %v47
    %vm49 = vcmp.eq.s32.totalorder %v43, %v48
    %vm50 = vcmp.eq.s32.totalorder %v44, %v48
    %v51 = vsel %vm49, 1, 0
    %v52 = vsel %vm50, 1, 0
    %v53 = vcvt.s32.f32 %v51
    %v54 = vcvt.s32.f32 %v52
    %vm55 = vcmask 261120
    %v56 = vsel %vm55, %v28, -inf
    %vm57 = vcmask 253952
    %v58 = vsel %vm57, %v29, -inf
    %v59 = vmax.f32 %v56, %v58
    %v60 = vrot.slane %v59, 4
    %v61 = vmax.f32 %v59, %v60
    %v62 = vrot.slane %v61, 2
    %v63 = vmax.f32 %v61, %v62
    %v64 = vrot.slane %v63, 1
    %v65 = vmax.f32 %v63, %v64
    %v66 = vsub.f32 %v28, %v65
    %v67 = vsub.f32 %v29, %v65
    %v68 = vmul.f32 %v66, 1.442695
    %v69 = vpow.pop %v68
    %v70 = vmul.f32 %v67, 1.442695
    %v71 = vpow.pop %v70
    %v72 = vsel %vm55, %v69, 0.0
    %v73 = vsel %vm57, %v71, 0.0
    %v74 = vadd.f32 %v72, %v73
    %v75 = vrot.slane %v74, 4
    %v76 = vadd.f32 %v74, %v75
    %v77 = vrot.slane %v76, 2
    %v78 = vadd.f32 %v76, %v77
    %v79 = vrot.slane %v78, 1
    %v80 = vadd.f32 %v78, %v79
    %v81 = vmul.f32 %v53, %v28
    %v82 = vmul.f32 %v54, %v29
    %v83 = vsel %vm55, %v81, 0.0
    %v84 = vsel %vm57, %v82, 0.0
    %v85 = vadd.f32 %v83, %v84
    %v86 = vrot.slane %v85, 4
    %v87 = vadd.f32 %v85, %v86
    %v88 = vrot.slane %v87, 2
    %v89 = vadd.f32 %v87, %v88
    %v90 = vrot.slane %v89, 1
    %v91 = vadd.f32 %v89, %v90
    %v92 = vlog2.pop %v80
    %v93 = vmul.f32 %v92, 0.6931472
    %v94 = vadd.f32 %v93, %v65
    %v95 = vsub.f32 %v94, %v91
    %v96 = vsub.f32 %v91, %v65
    %v97 = vmul.f32 %v96, 1.442695
    %v98 = vpow.pop %v97
    %v99 = vrcp.pop %v80
    %v100 = vmul.f32 %v98, %v99
    %v101 = vsub.f32 1.0, %v100
    %v102 = vmax.f32 %v101, 0.0
    %v103 = vmul.f32 %v102, %v102
    %v104 = vmul.f32 %v103, %v95
    %v105 = vmul.f32 %v104, 0.25
    %v106 = vsel %vm40, %v105, 0.0
    %v107 = vsel %vm57, %v106, 0.0
    %108 = vadd.xlane.f32.xlu0 %v107
    %v109 = vpop.xlane.xlu0 %108
    %v110 = vrot.slane %v109, 4
    %v111 = vadd.f32 %v109, %v110
    %v112 = vrot.slane %v111, 2
    %v113 = vadd.f32 %v111, %v112
    %v114 = vrot.slane %v113, 1
    %v115 = vadd.f32 %v113, %v114
    %s116 = vtos %v115
    %v117 = vsel %vm40, 1, 0
    %v118 = vcvt.s32.f32 %v117
    %v119 = vsel %vm57, %v118, 0.0
    %120 = vadd.xlane.f32.xlu0 %v119
    %v121 = vpop.xlane.xlu0 %120
    %v122 = vrot.slane %v121, 4
    %v123 = vadd.f32 %v121, %v122
    %v124 = vrot.slane %v123, 2
    %v125 = vadd.f32 %v123, %v124
    %v126 = vrot.slane %v125, 1
    %v127 = vadd.f32 %v125, %v126
    %s128 = vtos %v127
    %vm129 = vcmp.eq.s32.totalorder %v43, 0
    %v130 = vstv %s116
    %v131 = vstv %s128
    %v132 = vsel %vm129, %v130, %v131
    %133 = vst [vmem:[#allocation7] sm:$0xff] %v132
    // Predicated region
    $region14: #{tpu_custom_call.1} parent=1 // pred_check
      _
    $region15: #{tpu_custom_call.1} parent=1 // pred_check_branch
      %135 = sbr.rel (0) target = $region17
    $region16: #{tpu_custom_call.1} parent=1 // pred_region
      %s137 = ssub.s32 128, 128
      %138 = vsyncadd [#allocation6], %s137
      %s140 = sshll.u32 [#allocation7], 4
      %s141 = int_to_ptr.vmem [resolvable:$true] %s140
      %143 = dma.vmem_to_hbm [thread:$0]  %s141, 128, %s3, [#allocation6]
    $region17: #{tpu_custom_call.1} parent=1 // pred_fallthru
      _
    // Predicated region
    $region18: #{tpu_custom_call.1} parent=1 // pred_check
      _
    $region19: #{tpu_custom_call.1} parent=1 // pred_check_branch
      %145 = sbr.rel (0) target = $region21
    $region20: #{tpu_custom_call.1} parent=1 // pred_region
      %146 = dma.done [#allocation6], 128
    $region21: #{tpu_custom_call.1} parent=1 // pred_fallthru
      _
    %147 = vsyncpa [#allocation5], 1
    %148 = vsyncpa [#allocation6], 1

</llo_original>
